<compile_context>
chip_gen: v7x
topology: tpu7x:2x2x1
jax: 0.10.0
libtpu: 0.0.40
codegen_flags: <defaults>
</compile_context>

<pallas_src>
import numpy as np
import jax
import jax.numpy as jnp
from jax.experimental import pallas as pl
from jax.experimental.pallas import tpu as pltpu

# ---------------- module hyper-parameters (small, consistent with the spec) ----
B = 2
C_IN = 4                     # in_channels
T = 64                       # sequence length (B*T = 128 -> one lane group)
N_FILTERS = 8                # n_filters -> out channels = 4 * n_filters = 32
BOTTLENECK = 32              # bottleneck_channels
KERNEL_SIZES = (10, 20, 40)  # default kernel_sizes
C_OUT = 4 * N_FILTERS
BN_EPS = 1e-5

# PyTorch 'same' padding for even kernels: left = (k-1)//2, right = k//2
L_PADS = tuple((k - 1) // 2 for k in KERNEL_SIZES)                   # (4, 9, 19)
L_MAX = max(L_PADS)                                                  # 19
W_WIN = max(max(k + (L_MAX - l) for k, l in zip(KERNEL_SIZES, L_PADS)),
            L_MAX + 2)                                               # 40 (covers maxpool too)
F_DIM = C_IN * W_WIN                                                 # 160 contraction rows


# ================================ Pallas kernel ================================

def _make_inception_kernel(n_batch, c_in, seq):
    """Fused Inception forward. Output layout: (C_OUT, n_batch*seq), lanes=(b,t)."""
    lo = (L_MAX - 1) * c_in            # sublane offset of the x[t-1] rows in the slab

    def kernel(xp_ref, wcT_ref, wmpT_ref, bias_ref, o_ref):
        # Raw zero-padded input: (n_batch*c_in, seq + W_WIN - 1) f32 (~1 vreg).
        x = xp_ref[...]

        # ---- in-kernel im2col: rows=(tap, ch), lanes=(batch, time) -------------
        # patches[(m, c), b*seq + t] = x_zero_padded[b, c, t + m]  (= x[b,c,t+m-L_MAX])
        cols = []
        for m in range(W_WIN):
            cols.append(jnp.concatenate(
                [x[bb * c_in:(bb + 1) * c_in, m:m + seq] for bb in range(n_batch)],
                axis=1))                                              # (c_in, n_batch*seq)
        patches = jnp.concatenate(cols, axis=0)                       # (F_DIM, n_batch*seq) f32

        # ---- MaxPool1d(kernel=3, stride=1, padding=1) over time ----------------
        # Contiguous sublane slices of taps L_MAX-1 / L_MAX / L_MAX+1; PyTorch pads
        # with -inf for max pooling -> mask invalid neighbours at sequence edges.
        col_t = jax.lax.broadcasted_iota(jnp.int32, (c_in, n_batch * seq), 1) % seq
        neg_inf = jnp.float32(-jnp.inf)
        x_m1 = jnp.where(col_t > 0,       patches[lo:lo + c_in, :],             neg_inf)
        x_0  =                            patches[lo + c_in:lo + 2 * c_in, :]
        x_p1 = jnp.where(col_t < seq - 1, patches[lo + 2 * c_in:lo + 3 * c_in, :], neg_inf)
        z_mp = jnp.maximum(jnp.maximum(x_m1, x_0), x_p1)              # (c_in, n_batch*seq) f32

        # ---- one banded bf16 matmul = bottleneck + 3 'same' convs (+ BN scale) --
        z = jnp.dot(wcT_ref[...], patches.astype(jnp.bfloat16),
                    preferred_element_type=jnp.float32)               # (C_OUT, n_batch*seq)
        # ---- maxpool-branch 1x1 conv (+ BN scale), tiny f32 matmul --------------
        z = z + jnp.dot(wmpT_ref[...], z_mp, preferred_element_type=jnp.float32)
        z = z + bias_ref[...]                                          # BN shift (C_OUT, 1)
        o_ref[...] = jnp.maximum(z, 0.0).astype(o_ref.dtype)           # ReLU, lane-dense store

    return kernel


# ======================= host-side one-time weight folding =====================

def fold_inception_weights(params, eps=BN_EPS):
    """Fold bottleneck + three 'same' convs + eval-mode BN into:
       WcT (C_OUT, F_DIM) bf16, WmpT (C_OUT, C_IN) f32, bias (C_OUT, 1) f32."""
    wb = params["bottleneck_w"]                                        # (BOTTLENECK, C_IN)
    wcT = jnp.zeros((C_OUT, F_DIM), jnp.float32)
    for i, (k, l) in enumerate(zip(KERNEL_SIZES, L_PADS)):
        w = params[f"conv{i + 1}_w"]                                   # (N_FILTERS, BOTTLENECK, k)
        comp = jnp.einsum("fbj,bc->fcj", w, wb)                        # (N_FILTERS, C_IN, k)
        blockT = jnp.transpose(comp, (0, 2, 1)).reshape(N_FILTERS, k * C_IN)  # cols=(tap, ch)
        off = L_MAX - l                                                # align to shared window
        wcT = wcT.at[i * N_FILTERS:(i + 1) * N_FILTERS,
                     off * C_IN:(off + k) * C_IN].set(blockT)

    wmpT = jnp.zeros((C_OUT, C_IN), jnp.float32)
    wmpT = wmpT.at[3 * N_FILTERS:, :].set(params["conv_mp_w"])         # (N_FILTERS, C_IN)

    scale = params["bn_gamma"] * jax.lax.rsqrt(params["bn_var"] + eps)
    shift = params["bn_beta"] - params["bn_mean"] * scale
    wcT = (wcT * scale[:, None]).astype(jnp.bfloat16)                  # bf16 MXU operands
    wmpT = wmpT * scale[:, None]
    return wcT, wmpT, shift.reshape(C_OUT, 1).astype(jnp.float32)


# ================================ forward wrapper ==============================

@jax.jit
def inception_forward(x, wcT, wmpT, bias):
    """x: (B, C_in, T) NCW  ->  (B, 4*n_filters, T) NCW (matches PyTorch)."""
    b, c, t = x.shape
    t_pad = t + W_WIN - 1

    # Only host-side prep: tiny zero-pad (+ free leading-dim merge) of the raw input.
    xpad = jnp.pad(x.astype(jnp.float32),
                   ((0, 0), (0, 0), (L_MAX, W_WIN - 1 - L_MAX))).reshape(b * c, t_pad)

    kernel = _make_inception_kernel(b, c, t)
    out = pl.pallas_call(
        kernel,
        out_shape=jax.ShapeDtypeStruct((C_OUT, b * t), jnp.float32),   # lane-dense output
        grid=(1,),                                                     # single step on all gens
        in_specs=[
            pl.BlockSpec((b * c, t_pad), lambda i: (0, 0)),            # raw padded input (~3.3 KiB)
            pl.BlockSpec((C_OUT, F_DIM), lambda i: (0, 0)),            # folded banded conv weights
            pl.BlockSpec((C_OUT, C_IN), lambda i: (0, 0)),             # maxpool-branch weights
            pl.BlockSpec((C_OUT, 1), lambda i: (0, 0)),                # BN shift
        ],
        out_specs=pl.BlockSpec((C_OUT, b * t), lambda i: (0, 0)),
        compiler_params=pltpu.CompilerParams(dimension_semantics=("arbitrary",)),
    )(xpad, wcT, wmpT, bias)

    # (C_OUT, B*T) with lanes (b, t)  ->  (B, C_OUT, T) NCW (cheap 32 KiB transpose)
    return out.reshape(C_OUT, b, t).transpose(1, 0, 2)


# ============================ pure-JAX reference ===============================

def inception_reference(x, params, eps=BN_EPS):
    dn = ("NCH", "OIH", "NCH")

    def conv_same(v, w, k):
        l = (k - 1) // 2
        return jax.lax.conv_general_dilated(v, w, (1,), [(l, k - 1 - l)],
                                            dimension_numbers=dn)

    zb = jax.lax.conv_general_dilated(x, params["bottleneck_w"][:, :, None], (1,),
                                      [(0, 0)], dimension_numbers=dn)
    zmp = jax.lax.reduce_window(x, -jnp.inf, jax.lax.max,
                                (1, 1, 3), (1, 1, 1), ((0, 0), (0, 0), (1, 1)))
    z1 = conv_same(zb, params["conv1_w"], KERNEL_SIZES[0])
    z2 = conv_same(zb, params["conv2_w"], KERNEL_SIZES[1])
    z3 = conv_same(zb, params["conv3_w"], KERNEL_SIZES[2])
    z4 = jax.lax.conv_general_dilated(zmp, params["conv_mp_w"][:, :, None], (1,),
                                      [(0, 0)], dimension_numbers=dn)
    z = jnp.concatenate([z1, z2, z3, z4], axis=1)
    scale = params["bn_gamma"] * jax.lax.rsqrt(params["bn_var"] + eps)
    shift = params["bn_beta"] - params["bn_mean"] * scale
    z = z * scale[None, :, None] + shift[None, :, None]
    return jnp.maximum(z, 0.0)


# ==================================== main =====================================

if __name__ == "__main__":
    key = jax.random.PRNGKey(0)
    kx, k0, k1, k2, k3, k4 = jax.random.split(key, 6)
    x = jax.random.normal(kx, (B, C_IN, T), dtype=jnp.float32)

    params = {
        "bottleneck_w": 0.1 * jax.random.normal(k0, (BOTTLENECK, C_IN), jnp.float32),
        "conv1_w": 0.1 * jax.random.normal(k1, (N_FILTERS, BOTTLENECK, KERNEL_SIZES[0]), jnp.float32),
        "conv2_w": 0.1 * jax.random.normal(k2, (N_FILTERS, BOTTLENECK, KERNEL_SIZES[1]), jnp.float32),
        "conv3_w": 0.1 * jax.random.normal(k3, (N_FILTERS, BOTTLENECK, KERNEL_SIZES[2]), jnp.float32),
        "conv_mp_w": 0.1 * jax.random.normal(k4, (N_FILTERS, C_IN), jnp.float32),
        "bn_gamma": jnp.ones((C_OUT,), jnp.float32),
        "bn_beta": jnp.zeros((C_OUT,), jnp.float32),
        "bn_mean": jnp.zeros((C_OUT,), jnp.float32),
        "bn_var": jnp.ones((C_OUT,), jnp.float32),
    }

    wcT, wmpT, bias = fold_inception_weights(params)
    out = jax.block_until_ready(inception_forward(x, wcT, wmpT, bias))
    assert out.shape == (B, C_OUT, T)

    ref = jax.block_until_ready(inception_reference(x, params))
    # Tolerance sized for the bf16 banded-matmul operands (maxpool branch, bias,
    # ReLU stay f32); structural/window-offset bugs would exceed this by >>10x.
    np.testing.assert_allclose(np.asarray(out), np.asarray(ref), rtol=2e-2, atol=2e-2)

    print("KERNEL_OK")
</pallas_src>

<mosaic_0001>
module attributes {stable_mosaic.version = 11 : i64} {
  func.func @kernel(%arg0: i32, %arg1: memref<8x103xf32, #tpu.memory_space<vmem>>, %arg2: memref<32x160xbf16, #tpu.memory_space<vmem>>, %arg3: memref<32x4xf32, #tpu.memory_space<vmem>>, %arg4: memref<32x1xf32, #tpu.memory_space<vmem>>, %arg5: memref<32x128xf32, #tpu.memory_space<vmem>>) attributes {dimension_semantics = [#tpu.dimension_semantics<arbitrary>], iteration_bounds = array<i64: 1>, scalar_prefetch = 0 : i64, scratch_operands = 0 : i64, tpu.core_type = #tpu.core_type<tc>, window_params = [{pipeline_mode = #tpu.pipeline_mode<synchronous>, transform_indices = @transform_0, window_bounds = array<i64: 8, 103>}, {pipeline_mode = #tpu.pipeline_mode<synchronous>, transform_indices = @transform_1, window_bounds = array<i64: 32, 160>}, {pipeline_mode = #tpu.pipeline_mode<synchronous>, transform_indices = @transform_2, window_bounds = array<i64: 32, 4>}, {pipeline_mode = #tpu.pipeline_mode<synchronous>, transform_indices = @transform_3, window_bounds = array<i64: 32, 1>}, {pipeline_mode = #tpu.pipeline_mode<synchronous>, transform_indices = @transform_4, window_bounds = array<i64: 32, 128>}]} {
    %c0 = arith.constant 0 : index
    %c0_0 = arith.constant 0 : index
    %0 = vector.load %arg1[%c0, %c0_0] : memref<8x103xf32, #tpu.memory_space<vmem>>, vector<8x103xf32>
    %1 = vector.extract_strided_slice %0 {offsets = [0, 0], sizes = [4, 64], strides = [1, 1]} : vector<8x103xf32> to vector<4x64xf32>
    %2 = vector.extract_strided_slice %0 {offsets = [4, 0], sizes = [4, 64], strides = [1, 1]} : vector<8x103xf32> to vector<4x64xf32>
    %3 = tpu.concatenate %1, %2 in 1 : vector<4x64xf32>, vector<4x64xf32> -> vector<4x128xf32>
    %4 = vector.extract_strided_slice %0 {offsets = [0, 1], sizes = [4, 64], strides = [1, 1]} : vector<8x103xf32> to vector<4x64xf32>
    %5 = vector.extract_strided_slice %0 {offsets = [4, 1], sizes = [4, 64], strides = [1, 1]} : vector<8x103xf32> to vector<4x64xf32>
    %6 = tpu.concatenate %4, %5 in 1 : vector<4x64xf32>, vector<4x64xf32> -> vector<4x128xf32>
    %7 = vector.extract_strided_slice %0 {offsets = [0, 2], sizes = [4, 64], strides = [1, 1]} : vector<8x103xf32> to vector<4x64xf32>
    %8 = vector.extract_strided_slice %0 {offsets = [4, 2], sizes = [4, 64], strides = [1, 1]} : vector<8x103xf32> to vector<4x64xf32>
    %9 = tpu.concatenate %7, %8 in 1 : vector<4x64xf32>, vector<4x64xf32> -> vector<4x128xf32>
    %10 = vector.extract_strided_slice %0 {offsets = [0, 3], sizes = [4, 64], strides = [1, 1]} : vector<8x103xf32> to vector<4x64xf32>
    %11 = vector.extract_strided_slice %0 {offsets = [4, 3], sizes = [4, 64], strides = [1, 1]} : vector<8x103xf32> to vector<4x64xf32>
    %12 = tpu.concatenate %10, %11 in 1 : vector<4x64xf32>, vector<4x64xf32> -> vector<4x128xf32>
    %13 = vector.extract_strided_slice %0 {offsets = [0, 4], sizes = [4, 64], strides = [1, 1]} : vector<8x103xf32> to vector<4x64xf32>
    %14 = vector.extract_strided_slice %0 {offsets = [4, 4], sizes = [4, 64], strides = [1, 1]} : vector<8x103xf32> to vector<4x64xf32>
    %15 = tpu.concatenate %13, %14 in 1 : vector<4x64xf32>, vector<4x64xf32> -> vector<4x128xf32>
    %16 = vector.extract_strided_slice %0 {offsets = [0, 5], sizes = [4, 64], strides = [1, 1]} : vector<8x103xf32> to vector<4x64xf32>
    %17 = vector.extract_strided_slice %0 {offsets = [4, 5], sizes = [4, 64], strides = [1, 1]} : vector<8x103xf32> to vector<4x64xf32>
    %18 = tpu.concatenate %16, %17 in 1 : vector<4x64xf32>, vector<4x64xf32> -> vector<4x128xf32>
    %19 = vector.extract_strided_slice %0 {offsets = [0, 6], sizes = [4, 64], strides = [1, 1]} : vector<8x103xf32> to vector<4x64xf32>
    %20 = vector.extract_strided_slice %0 {offsets = [4, 6], sizes = [4, 64], strides = [1, 1]} : vector<8x103xf32> to vector<4x64xf32>
    %21 = tpu.concatenate %19, %20 in 1 : vector<4x64xf32>, vector<4x64xf32> -> vector<4x128xf32>
    %22 = vector.extract_strided_slice %0 {offsets = [0, 7], sizes = [4, 64], strides = [1, 1]} : vector<8x103xf32> to vector<4x64xf32>
    %23 = vector.extract_strided_slice %0 {offsets = [4, 7], sizes = [4, 64], strides = [1, 1]} : vector<8x103xf32> to vector<4x64xf32>
    %24 = tpu.concatenate %22, %23 in 1 : vector<4x64xf32>, vector<4x64xf32> -> vector<4x128xf32>
    %25 = vector.extract_strided_slice %0 {offsets = [0, 8], sizes = [4, 64], strides = [1, 1]} : vector<8x103xf32> to vector<4x64xf32>
    %26 = vector.extract_strided_slice %0 {offsets = [4, 8], sizes = [4, 64], strides = [1, 1]} : vector<8x103xf32> to vector<4x64xf32>
    %27 = tpu.concatenate %25, %26 in 1 : vector<4x64xf32>, vector<4x64xf32> -> vector<4x128xf32>
    %28 = vector.extract_strided_slice %0 {offsets = [0, 9], sizes = [4, 64], strides = [1, 1]} : vector<8x103xf32> to vector<4x64xf32>
    %29 = vector.extract_strided_slice %0 {offsets = [4, 9], sizes = [4, 64], strides = [1, 1]} : vector<8x103xf32> to vector<4x64xf32>
    %30 = tpu.concatenate %28, %29 in 1 : vector<4x64xf32>, vector<4x64xf32> -> vector<4x128xf32>
    %31 = vector.extract_strided_slice %0 {offsets = [0, 10], sizes = [4, 64], strides = [1, 1]} : vector<8x103xf32> to vector<4x64xf32>
    %32 = vector.extract_strided_slice %0 {offsets = [4, 10], sizes = [4, 64], strides = [1, 1]} : vector<8x103xf32> to vector<4x64xf32>
    %33 = tpu.concatenate %31, %32 in 1 : vector<4x64xf32>, vector<4x64xf32> -> vector<4x128xf32>
    %34 = vector.extract_strided_slice %0 {offsets = [0, 11], sizes = [4, 64], strides = [1, 1]} : vector<8x103xf32> to vector<4x64xf32>
    %35 = vector.extract_strided_slice %0 {offsets = [4, 11], sizes = [4, 64], strides = [1, 1]} : vector<8x103xf32> to vector<4x64xf32>
    %36 = tpu.concatenate %34, %35 in 1 : vector<4x64xf32>, vector<4x64xf32> -> vector<4x128xf32>
    %37 = vector.extract_strided_slice %0 {offsets = [0, 12], sizes = [4, 64], strides = [1, 1]} : vector<8x103xf32> to vector<4x64xf32>
    %38 = vector.extract_strided_slice %0 {offsets = [4, 12], sizes = [4, 64], strides = [1, 1]} : vector<8x103xf32> to vector<4x64xf32>
    %39 = tpu.concatenate %37, %38 in 1 : vector<4x64xf32>, vector<4x64xf32> -> vector<4x128xf32>
    %40 = vector.extract_strided_slice %0 {offsets = [0, 13], sizes = [4, 64], strides = [1, 1]} : vector<8x103xf32> to vector<4x64xf32>
    %41 = vector.extract_strided_slice %0 {offsets = [4, 13], sizes = [4, 64], strides = [1, 1]} : vector<8x103xf32> to vector<4x64xf32>
    %42 = tpu.concatenate %40, %41 in 1 : vector<4x64xf32>, vector<4x64xf32> -> vector<4x128xf32>
    %43 = vector.extract_strided_slice %0 {offsets = [0, 14], sizes = [4, 64], strides = [1, 1]} : vector<8x103xf32> to vector<4x64xf32>
    %44 = vector.extract_strided_slice %0 {offsets = [4, 14], sizes = [4, 64], strides = [1, 1]} : vector<8x103xf32> to vector<4x64xf32>
    %45 = tpu.concatenate %43, %44 in 1 : vector<4x64xf32>, vector<4x64xf32> -> vector<4x128xf32>
    %46 = vector.extract_strided_slice %0 {offsets = [0, 15], sizes = [4, 64], strides = [1, 1]} : vector<8x103xf32> to vector<4x64xf32>
    %47 = vector.extract_strided_slice %0 {offsets = [4, 15], sizes = [4, 64], strides = [1, 1]} : vector<8x103xf32> to vector<4x64xf32>
    %48 = tpu.concatenate %46, %47 in 1 : vector<4x64xf32>, vector<4x64xf32> -> vector<4x128xf32>
    %49 = vector.extract_strided_slice %0 {offsets = [0, 16], sizes = [4, 64], strides = [1, 1]} : vector<8x103xf32> to vector<4x64xf32>
    %50 = vector.extract_strided_slice %0 {offsets = [4, 16], sizes = [4, 64], strides = [1, 1]} : vector<8x103xf32> to vector<4x64xf32>
    %51 = tpu.concatenate %49, %50 in 1 : vector<4x64xf32>, vector<4x64xf32> -> vector<4x128xf32>
    %52 = vector.extract_strided_slice %0 {offsets = [0, 17], sizes = [4, 64], strides = [1, 1]} : vector<8x103xf32> to vector<4x64xf32>
    %53 = vector.extract_strided_slice %0 {offsets = [4, 17], sizes = [4, 64], strides = [1, 1]} : vector<8x103xf32> to vector<4x64xf32>
    %54 = tpu.concatenate %52, %53 in 1 : vector<4x64xf32>, vector<4x64xf32> -> vector<4x128xf32>
    %55 = vector.extract_strided_slice %0 {offsets = [0, 18], sizes = [4, 64], strides = [1, 1]} : vector<8x103xf32> to vector<4x64xf32>
    %56 = vector.extract_strided_slice %0 {offsets = [4, 18], sizes = [4, 64], strides = [1, 1]} : vector<8x103xf32> to vector<4x64xf32>
    %57 = tpu.concatenate %55, %56 in 1 : vector<4x64xf32>, vector<4x64xf32> -> vector<4x128xf32>
    %58 = vector.extract_strided_slice %0 {offsets = [0, 19], sizes = [4, 64], strides = [1, 1]} : vector<8x103xf32> to vector<4x64xf32>
    %59 = vector.extract_strided_slice %0 {offsets = [4, 19], sizes = [4, 64], strides = [1, 1]} : vector<8x103xf32> to vector<4x64xf32>
    %60 = tpu.concatenate %58, %59 in 1 : vector<4x64xf32>, vector<4x64xf32> -> vector<4x128xf32>
    %61 = vector.extract_strided_slice %0 {offsets = [0, 20], sizes = [4, 64], strides = [1, 1]} : vector<8x103xf32> to vector<4x64xf32>
    %62 = vector.extract_strided_slice %0 {offsets = [4, 20], sizes = [4, 64], strides = [1, 1]} : vector<8x103xf32> to vector<4x64xf32>
    %63 = tpu.concatenate %61, %62 in 1 : vector<4x64xf32>, vector<4x64xf32> -> vector<4x128xf32>
    %64 = vector.extract_strided_slice %0 {offsets = [0, 21], sizes = [4, 64], strides = [1, 1]} : vector<8x103xf32> to vector<4x64xf32>
    %65 = vector.extract_strided_slice %0 {offsets = [4, 21], sizes = [4, 64], strides = [1, 1]} : vector<8x103xf32> to vector<4x64xf32>
    %66 = tpu.concatenate %64, %65 in 1 : vector<4x64xf32>, vector<4x64xf32> -> vector<4x128xf32>
    %67 = vector.extract_strided_slice %0 {offsets = [0, 22], sizes = [4, 64], strides = [1, 1]} : vector<8x103xf32> to vector<4x64xf32>
    %68 = vector.extract_strided_slice %0 {offsets = [4, 22], sizes = [4, 64], strides = [1, 1]} : vector<8x103xf32> to vector<4x64xf32>
    %69 = tpu.concatenate %67, %68 in 1 : vector<4x64xf32>, vector<4x64xf32> -> vector<4x128xf32>
    %70 = vector.extract_strided_slice %0 {offsets = [0, 23], sizes = [4, 64], strides = [1, 1]} : vector<8x103xf32> to vector<4x64xf32>
    %71 = vector.extract_strided_slice %0 {offsets = [4, 23], sizes = [4, 64], strides = [1, 1]} : vector<8x103xf32> to vector<4x64xf32>
    %72 = tpu.concatenate %70, %71 in 1 : vector<4x64xf32>, vector<4x64xf32> -> vector<4x128xf32>
    %73 = vector.extract_strided_slice %0 {offsets = [0, 24], sizes = [4, 64], strides = [1, 1]} : vector<8x103xf32> to vector<4x64xf32>
    %74 = vector.extract_strided_slice %0 {offsets = [4, 24], sizes = [4, 64], strides = [1, 1]} : vector<8x103xf32> to vector<4x64xf32>
    %75 = tpu.concatenate %73, %74 in 1 : vector<4x64xf32>, vector<4x64xf32> -> vector<4x128xf32>
    %76 = vector.extract_strided_slice %0 {offsets = [0, 25], sizes = [4, 64], strides = [1, 1]} : vector<8x103xf32> to vector<4x64xf32>
    %77 = vector.extract_strided_slice %0 {offsets = [4, 25], sizes = [4, 64], strides = [1, 1]} : vector<8x103xf32> to vector<4x64xf32>
    %78 = tpu.concatenate %76, %77 in 1 : vector<4x64xf32>, vector<4x64xf32> -> vector<4x128xf32>
    %79 = vector.extract_strided_slice %0 {offsets = [0, 26], sizes = [4, 64], strides = [1, 1]} : vector<8x103xf32> to vector<4x64xf32>
    %80 = vector.extract_strided_slice %0 {offsets = [4, 26], sizes = [4, 64], strides = [1, 1]} : vector<8x103xf32> to vector<4x64xf32>
    %81 = tpu.concatenate %79, %80 in 1 : vector<4x64xf32>, vector<4x64xf32> -> vector<4x128xf32>
    %82 = vector.extract_strided_slice %0 {offsets = [0, 27], sizes = [4, 64], strides = [1, 1]} : vector<8x103xf32> to vector<4x64xf32>
    %83 = vector.extract_strided_slice %0 {offsets = [4, 27], sizes = [4, 64], strides = [1, 1]} : vector<8x103xf32> to vector<4x64xf32>
    %84 = tpu.concatenate %82, %83 in 1 : vector<4x64xf32>, vector<4x64xf32> -> vector<4x128xf32>
    %85 = vector.extract_strided_slice %0 {offsets = [0, 28], sizes = [4, 64], strides = [1, 1]} : vector<8x103xf32> to vector<4x64xf32>
    %86 = vector.extract_strided_slice %0 {offsets = [4, 28], sizes = [4, 64], strides = [1, 1]} : vector<8x103xf32> to vector<4x64xf32>
    %87 = tpu.concatenate %85, %86 in 1 : vector<4x64xf32>, vector<4x64xf32> -> vector<4x128xf32>
    %88 = vector.extract_strided_slice %0 {offsets = [0, 29], sizes = [4, 64], strides = [1, 1]} : vector<8x103xf32> to vector<4x64xf32>
    %89 = vector.extract_strided_slice %0 {offsets = [4, 29], sizes = [4, 64], strides = [1, 1]} : vector<8x103xf32> to vector<4x64xf32>
    %90 = tpu.concatenate %88, %89 in 1 : vector<4x64xf32>, vector<4x64xf32> -> vector<4x128xf32>
    %91 = vector.extract_strided_slice %0 {offsets = [0, 30], sizes = [4, 64], strides = [1, 1]} : vector<8x103xf32> to vector<4x64xf32>
    %92 = vector.extract_strided_slice %0 {offsets = [4, 30], sizes = [4, 64], strides = [1, 1]} : vector<8x103xf32> to vector<4x64xf32>
    %93 = tpu.concatenate %91, %92 in 1 : vector<4x64xf32>, vector<4x64xf32> -> vector<4x128xf32>
    %94 = vector.extract_strided_slice %0 {offsets = [0, 31], sizes = [4, 64], strides = [1, 1]} : vector<8x103xf32> to vector<4x64xf32>
    %95 = vector.extract_strided_slice %0 {offsets = [4, 31], sizes = [4, 64], strides = [1, 1]} : vector<8x103xf32> to vector<4x64xf32>
    %96 = tpu.concatenate %94, %95 in 1 : vector<4x64xf32>, vector<4x64xf32> -> vector<4x128xf32>
    %97 = vector.extract_strided_slice %0 {offsets = [0, 32], sizes = [4, 64], strides = [1, 1]} : vector<8x103xf32> to vector<4x64xf32>
    %98 = vector.extract_strided_slice %0 {offsets = [4, 32], sizes = [4, 64], strides = [1, 1]} : vector<8x103xf32> to vector<4x64xf32>
    %99 = tpu.concatenate %97, %98 in 1 : vector<4x64xf32>, vector<4x64xf32> -> vector<4x128xf32>
    %100 = vector.extract_strided_slice %0 {offsets = [0, 33], sizes = [4, 64], strides = [1, 1]} : vector<8x103xf32> to vector<4x64xf32>
    %101 = vector.extract_strided_slice %0 {offsets = [4, 33], sizes = [4, 64], strides = [1, 1]} : vector<8x103xf32> to vector<4x64xf32>
    %102 = tpu.concatenate %100, %101 in 1 : vector<4x64xf32>, vector<4x64xf32> -> vector<4x128xf32>
    %103 = vector.extract_strided_slice %0 {offsets = [0, 34], sizes = [4, 64], strides = [1, 1]} : vector<8x103xf32> to vector<4x64xf32>
    %104 = vector.extract_strided_slice %0 {offsets = [4, 34], sizes = [4, 64], strides = [1, 1]} : vector<8x103xf32> to vector<4x64xf32>
    %105 = tpu.concatenate %103, %104 in 1 : vector<4x64xf32>, vector<4x64xf32> -> vector<4x128xf32>
    %106 = vector.extract_strided_slice %0 {offsets = [0, 35], sizes = [4, 64], strides = [1, 1]} : vector<8x103xf32> to vector<4x64xf32>
    %107 = vector.extract_strided_slice %0 {offsets = [4, 35], sizes = [4, 64], strides = [1, 1]} : vector<8x103xf32> to vector<4x64xf32>
    %108 = tpu.concatenate %106, %107 in 1 : vector<4x64xf32>, vector<4x64xf32> -> vector<4x128xf32>
    %109 = vector.extract_strided_slice %0 {offsets = [0, 36], sizes = [4, 64], strides = [1, 1]} : vector<8x103xf32> to vector<4x64xf32>
    %110 = vector.extract_strided_slice %0 {offsets = [4, 36], sizes = [4, 64], strides = [1, 1]} : vector<8x103xf32> to vector<4x64xf32>
    %111 = tpu.concatenate %109, %110 in 1 : vector<4x64xf32>, vector<4x64xf32> -> vector<4x128xf32>
    %112 = vector.extract_strided_slice %0 {offsets = [0, 37], sizes = [4, 64], strides = [1, 1]} : vector<8x103xf32> to vector<4x64xf32>
    %113 = vector.extract_strided_slice %0 {offsets = [4, 37], sizes = [4, 64], strides = [1, 1]} : vector<8x103xf32> to vector<4x64xf32>
    %114 = tpu.concatenate %112, %113 in 1 : vector<4x64xf32>, vector<4x64xf32> -> vector<4x128xf32>
    %115 = vector.extract_strided_slice %0 {offsets = [0, 38], sizes = [4, 64], strides = [1, 1]} : vector<8x103xf32> to vector<4x64xf32>
    %116 = vector.extract_strided_slice %0 {offsets = [4, 38], sizes = [4, 64], strides = [1, 1]} : vector<8x103xf32> to vector<4x64xf32>
    %117 = tpu.concatenate %115, %116 in 1 : vector<4x64xf32>, vector<4x64xf32> -> vector<4x128xf32>
    %118 = vector.extract_strided_slice %0 {offsets = [0, 39], sizes = [4, 64], strides = [1, 1]} : vector<8x103xf32> to vector<4x64xf32>
    %119 = vector.extract_strided_slice %0 {offsets = [4, 39], sizes = [4, 64], strides = [1, 1]} : vector<8x103xf32> to vector<4x64xf32>
    %120 = tpu.concatenate %118, %119 in 1 : vector<4x64xf32>, vector<4x64xf32> -> vector<4x128xf32>
    %121 = tpu.concatenate %3, %6, %9, %12, %15, %18, %21, %24, %27, %30, %33, %36, %39, %42, %45, %48 in 0 : vector<4x128xf32>, vector<4x128xf32>, vector<4x128xf32>, vector<4x128xf32>, vector<4x128xf32>, vector<4x128xf32>, vector<4x128xf32>, vector<4x128xf32>, vector<4x128xf32>, vector<4x128xf32>, vector<4x128xf32>, vector<4x128xf32>, vector<4x128xf32>, vector<4x128xf32>, vector<4x128xf32>, vector<4x128xf32> -> vector<64x128xf32>
    %122 = tpu.concatenate %51, %54, %57, %60, %63, %66, %69, %72, %75, %78, %81, %84, %87, %90, %93, %96 in 0 : vector<4x128xf32>, vector<4x128xf32>, vector<4x128xf32>, vector<4x128xf32>, vector<4x128xf32>, vector<4x128xf32>, vector<4x128xf32>, vector<4x128xf32>, vector<4x128xf32>, vector<4x128xf32>, vector<4x128xf32>, vector<4x128xf32>, vector<4x128xf32>, vector<4x128xf32>, vector<4x128xf32>, vector<4x128xf32> -> vector<64x128xf32>
    %123 = tpu.concatenate %99, %102, %105, %108, %111, %114, %117, %120 in 0 : vector<4x128xf32>, vector<4x128xf32>, vector<4x128xf32>, vector<4x128xf32>, vector<4x128xf32>, vector<4x128xf32>, vector<4x128xf32>, vector<4x128xf32> -> vector<32x128xf32>
    %124 = tpu.concatenate %121, %122, %123 in 0 : vector<64x128xf32>, vector<64x128xf32>, vector<32x128xf32> -> vector<160x128xf32>
    %125 = tpu.iota {dimensions = array<i32: 1>} : vector<4x128xi32>
    %c64_i32 = arith.constant 64 : i32
    %c0_i32 = arith.constant 0 : i32
    %126 = arith.cmpi eq, %c64_i32, %c0_i32 : i32
    %c1_i32 = arith.constant 1 : i32
    %127 = arith.select %126, %c1_i32, %c64_i32 : i32
    %128 = vector.broadcast %127 : i32 to vector<4x128xi32>
    %129 = arith.remsi %125, %128 : vector<4x128xi32>
    %c0_i32_1 = arith.constant 0 : i32
    %130 = vector.broadcast %c0_i32_1 : i32 to vector<4x128xi32>
    %131 = arith.cmpi ne, %129, %130 : vector<4x128xi32>
    %c0_i32_2 = arith.constant 0 : i32
    %132 = vector.broadcast %c0_i32_2 : i32 to vector<4x128xi32>
    %133 = arith.cmpi slt, %129, %132 : vector<4x128xi32>
    %c0_i32_3 = arith.constant 0 : i32
    %134 = arith.cmpi slt, %127, %c0_i32_3 : i32
    %135 = vector.broadcast %134 : i1 to vector<4x128xi1>
    %136 = vector.broadcast %135 : vector<4x128xi1> to vector<4x128xi1>
    %137 = arith.xori %133, %136 : vector<4x128xi1>
    %138 = arith.andi %137, %131 : vector<4x128xi1>
    %139 = vector.broadcast %127 : i32 to vector<4x128xi32>
    %140 = arith.addi %129, %139 : vector<4x128xi32>
    %141 = arith.select %138, %140, %129 : vector<4x128xi1>, vector<4x128xi32>
    %c0_i32_4 = arith.constant 0 : i32
    %142 = vector.broadcast %c0_i32_4 : i32 to vector<4x128xi32>
    %143 = arith.cmpi sgt, %141, %142 : vector<4x128xi32>
    %144 = vector.extract_strided_slice %124 {offsets = [72, 0], sizes = [4, 128], strides = [1, 1]} : vector<160x128xf32> to vector<4x128xf32>
    %cst = arith.constant 0xFF800000 : f32
    %145 = vector.broadcast %cst : f32 to vector<4x128xf32>
    %146 = arith.select %143, %144, %145 : vector<4x128xi1>, vector<4x128xf32>
    %147 = vector.extract_strided_slice %124 {offsets = [76, 0], sizes = [4, 128], strides = [1, 1]} : vector<160x128xf32> to vector<4x128xf32>
    %c63_i32 = arith.constant 63 : i32
    %148 = vector.broadcast %c63_i32 : i32 to vector<4x128xi32>
    %149 = arith.cmpi slt, %141, %148 : vector<4x128xi32>
    %150 = vector.extract_strided_slice %124 {offsets = [80, 0], sizes = [4, 128], strides = [1, 1]} : vector<160x128xf32> to vector<4x128xf32>
    %cst_5 = arith.constant 0xFF800000 : f32
    %151 = vector.broadcast %cst_5 : f32 to vector<4x128xf32>
    %152 = arith.select %149, %150, %151 : vector<4x128xi1>, vector<4x128xf32>
    %153 = arith.maximumf %146, %147 : vector<4x128xf32>
    %154 = arith.maximumf %153, %152 : vector<4x128xf32>
    %c0_6 = arith.constant 0 : index
    %c0_7 = arith.constant 0 : index
    %155 = vector.load %arg2[%c0_6, %c0_7] : memref<32x160xbf16, #tpu.memory_space<vmem>>, vector<32x160xbf16>
    %156 = arith.truncf %124 : vector<160x128xf32> to vector<160x128xbf16>
    %cst_8 = arith.constant dense<0.000000e+00> : vector<32x128xf32>
    %157 = tpu.matmul %155, %156, %cst_8 {dimension_numbers = #tpu.dot_dimension_numbers<[1], [0], [0], [1], [0, 0, 1, 1], [], []>} : vector<32x160xbf16>, vector<160x128xbf16>, vector<32x128xf32> -> vector<32x128xf32>
    %c0_9 = arith.constant 0 : index
    %c0_10 = arith.constant 0 : index
    %158 = vector.load %arg3[%c0_9, %c0_10] : memref<32x4xf32, #tpu.memory_space<vmem>>, vector<32x4xf32>
    %cst_11 = arith.constant dense<0.000000e+00> : vector<32x128xf32>
    %159 = tpu.matmul %158, %154, %cst_11 {dimension_numbers = #tpu.dot_dimension_numbers<[1], [0], [0], [1], [0, 0, 1, 1], [], []>} : vector<32x4xf32>, vector<4x128xf32>, vector<32x128xf32> -> vector<32x128xf32>
    %160 = arith.addf %157, %159 : vector<32x128xf32>
    %c0_12 = arith.constant 0 : index
    %c0_13 = arith.constant 0 : index
    %161 = vector.load %arg4[%c0_12, %c0_13] : memref<32x1xf32, #tpu.memory_space<vmem>>, vector<32x1xf32>
    %162 = vector.broadcast %161 : vector<32x1xf32> to vector<32x128xf32>
    %163 = arith.addf %160, %162 : vector<32x128xf32>
    %cst_14 = arith.constant 0.000000e+00 : f32
    %164 = vector.broadcast %cst_14 : f32 to vector<32x128xf32>
    %165 = arith.maximumf %163, %164 : vector<32x128xf32>
    %c0_15 = arith.constant 0 : index
    %c0_16 = arith.constant 0 : index
    %166 = vector.load %arg5[%c0_15, %c0_16] : memref<32x128xf32, #tpu.memory_space<vmem>>, vector<32x128xf32>
    tpu.vector_store %arg5[%c0_15, %c0_16], %165 {strides = array<i32>} : memref<32x128xf32, #tpu.memory_space<vmem>>, vector<32x128xf32>,
    return
  }
  func.func @transform_0(%arg0: i32) -> (i32, i32) {
    %c0_i32 = arith.constant 0 : i32
    %c0_i32_0 = arith.constant 0 : i32
    %c0_i32_1 = arith.constant 0 : i32
    return %c0_i32, %c0_i32_0 : i32, i32
  }
  func.func @transform_1(%arg0: i32) -> (i32, i32) {
    %c0_i32 = arith.constant 0 : i32
    %c0_i32_0 = arith.constant 0 : i32
    %c0_i32_1 = arith.constant 0 : i32
    return %c0_i32, %c0_i32_0 : i32, i32
  }
  func.func @transform_2(%arg0: i32) -> (i32, i32) {
    %c0_i32 = arith.constant 0 : i32
    %c0_i32_0 = arith.constant 0 : i32
    %c0_i32_1 = arith.constant 0 : i32
    return %c0_i32, %c0_i32_0 : i32, i32
  }
  func.func @transform_3(%arg0: i32) -> (i32, i32) {
    %c0_i32 = arith.constant 0 : i32
    %c0_i32_0 = arith.constant 0 : i32
    %c0_i32_1 = arith.constant 0 : i32
    return %c0_i32, %c0_i32_0 : i32, i32
  }
  func.func @transform_4(%arg0: i32) -> (i32, i32) {
    %c0_i32 = arith.constant 0 : i32
    %c0_i32_0 = arith.constant 0 : i32
    %c0_i32_1 = arith.constant 0 : i32
    return %c0_i32, %c0_i32_0 : i32, i32
  }
}

</mosaic_0001>

<llo_original>
// kernel: inception_forward.1
$region0: #{inception_forward.1}
  #allocation0 [shape = 'u32[]', space=smem, size = 0x4, offset = 0x4, fixed_abs, tag = 'smem constant byte address 0x4 - core index']
  #allocation1 [shape = 'u32[144,128]{1,0:T(1,128)}', space=vmem, size = 0x12000, scoped, tag = 'internal scratch']
  %s0 = inlined_call_operand.vmem [shape: f32[8,103], index: 0, kind: input, shape index: {}]
  %s1 = inlined_call_operand.vmem [shape: bf16[32,160], index: 1, kind: input, shape index: {}]
  %s2 = inlined_call_operand.vmem [shape: f32[32,4], index: 2, kind: input, shape index: {}]
  %s3 = inlined_call_operand.vmem [shape: f32[32,1], index: 3, kind: input, shape index: {}]
  %s4 = inlined_call_operand.vmem [shape: f32[32,128], index: 4, kind: output, shape index: {}]
  %s5 = sld [smem:[#allocation0]]
  $region26: #{inception_forward.1} parent=0
    _
  %s7 = ssub.s32 1, %s5
  %s8 = scalar_select 0, %s7, %s5
  // Predicated region
  $region2: #{inception_forward.1} parent=0 // pred_check
    _
  $region3: #{inception_forward.1} parent=0 // pred_check_branch
    %10 = sbr.rel (0) target = $region5
  $region4: #{inception_forward.1} parent=0 // pred_region
    _
  $region5: #{inception_forward.1} parent=0 // pred_fallthru
    _
  // Predicated region
  $region6: #{inception_forward.1} parent=0 // pred_check
    _
  $region7: #{inception_forward.1} parent=0 // pred_check_branch
    %12 = sbr.rel (0) target = $region9
  $region8: #{inception_forward.1} parent=0 // pred_region
    _
  $region9: #{inception_forward.1} parent=0 // pred_fallthru
    _
  // Predicated region
  $region10: #{inception_forward.1} parent=0 // pred_check
    _
  $region11: #{inception_forward.1} parent=0 // pred_check_branch
    %14 = sbr.rel (0) target = $region13
  $region12: #{inception_forward.1} parent=0 // pred_region
    _
  $region13: #{inception_forward.1} parent=0 // pred_fallthru
    _
  // Predicated region
  $region14: #{inception_forward.1} parent=0 // pred_check
    _
  $region15: #{inception_forward.1} parent=0 // pred_check_branch
    %16 = sbr.rel (0) target = $region17
  $region16: #{inception_forward.1} parent=0 // pred_region
    _
  $region17: #{inception_forward.1} parent=0 // pred_fallthru
    _
  %v18 = vld [vmem:[%s0] sm:$0xff]
  %v20 = vrot.slane %v18, 4
  %21 = vrot.lane.b32.xlu0 %v20, 64
  %v22 = vpop.permute.xlu0 %21
  %vm24 = vcmask 523264
  %v25 = vsel %vm24, %v18, %v22
  %26 = vrot.lane.b32.xlu0 %v18, 127
  %v27 = vpop.permute.xlu0 %26
  %29 = vrot.lane.b32.xlu0 %v20, 63
  %v30 = vpop.permute.xlu0 %29
  %v32 = vsel %vm24, %v27, %v30
  %33 = vrot.lane.b32.xlu0 %v18, 126
  %v34 = vpop.permute.xlu0 %33
  %36 = vrot.lane.b32.xlu0 %v20, 62
  %v37 = vpop.permute.xlu0 %36
  %v39 = vsel %vm24, %v34, %v37
  %40 = vrot.lane.b32.xlu0 %v18, 125
  %v41 = vpop.permute.xlu0 %40
  %43 = vrot.lane.b32.xlu0 %v20, 61
  %v44 = vpop.permute.xlu0 %43
  %v46 = vsel %vm24, %v41, %v44
  %47 = vrot.lane.b32.xlu0 %v18, 124
  %v48 = vpop.permute.xlu0 %47
  %50 = vrot.lane.b32.xlu0 %v20, 60
  %v51 = vpop.permute.xlu0 %50
  %v53 = vsel %vm24, %v48, %v51
  %54 = vrot.lane.b32.xlu0 %v18, 123
  %v55 = vpop.permute.xlu0 %54
  %57 = vrot.lane.b32.xlu0 %v20, 59
  %v58 = vpop.permute.xlu0 %57
  %v60 = vsel %vm24, %v55, %v58
  %61 = vrot.lane.b32.xlu0 %v18, 122
  %v62 = vpop.permute.xlu0 %61
  %64 = vrot.lane.b32.xlu0 %v20, 58
  %v65 = vpop.permute.xlu0 %64
  %v67 = vsel %vm24, %v62, %v65
  %68 = vrot.lane.b32.xlu0 %v18, 121
  %v69 = vpop.permute.xlu0 %68
  %71 = vrot.lane.b32.xlu0 %v20, 57
  %v72 = vpop.permute.xlu0 %71
  %v74 = vsel %vm24, %v69, %v72
  %75 = vrot.lane.b32.xlu0 %v18, 120
  %v76 = vpop.permute.xlu0 %75
  %78 = vrot.lane.b32.xlu0 %v20, 56
  %v79 = vpop.permute.xlu0 %78
  %v81 = vsel %vm24, %v76, %v79
  %82 = vrot.lane.b32.xlu0 %v18, 119
  %v83 = vpop.permute.xlu0 %82
  %85 = vrot.lane.b32.xlu0 %v20, 55
  %v86 = vpop.permute.xlu0 %85
  %v88 = vsel %vm24, %v83, %v86
  %89 = vrot.lane.b32.xlu0 %v18, 118
  %v90 = vpop.permute.xlu0 %89
  %92 = vrot.lane.b32.xlu0 %v20, 54
  %v93 = vpop.permute.xlu0 %92
  %v95 = vsel %vm24, %v90, %v93
  %96 = vrot.lane.b32.xlu0 %v18, 117
  %v97 = vpop.permute.xlu0 %96
  %99 = vrot.lane.b32.xlu0 %v20, 53
  %v100 = vpop.permute.xlu0 %99
  %v102 = vsel %vm24, %v97, %v100
  %103 = vrot.lane.b32.xlu0 %v18, 116
  %v104 = vpop.permute.xlu0 %103
  %106 = vrot.lane.b32.xlu0 %v20, 52
  %v107 = vpop.permute.xlu0 %106
  %v109 = vsel %vm24, %v104, %v107
  %110 = vrot.lane.b32.xlu0 %v18, 115
  %v111 = vpop.permute.xlu0 %110
  %113 = vrot.lane.b32.xlu0 %v20, 51
  %v114 = vpop.permute.xlu0 %113
  %v116 = vsel %vm24, %v111, %v114
  %117 = vrot.lane.b32.xlu0 %v18, 114
  %v118 = vpop.permute.xlu0 %117
  %120 = vrot.lane.b32.xlu0 %v20, 50
  %v121 = vpop.permute.xlu0 %120
  %v123 = vsel %vm24, %v118, %v121
  %124 = vrot.lane.b32.xlu0 %v18, 113
  %v125 = vpop.permute.xlu0 %124
  %127 = vrot.lane.b32.xlu0 %v20, 49
  %v128 = vpop.permute.xlu0 %127
  %v130 = vsel %vm24, %v125, %v128
  %131 = vrot.lane.b32.xlu0 %v18, 112
  %v132 = vpop.permute.xlu0 %131
  %134 = vrot.lane.b32.xlu0 %v20, 48
  %v135 = vpop.permute.xlu0 %134
  %v137 = vsel %vm24, %v132, %v135
  %138 = vrot.lane.b32.xlu0 %v18, 111
  %v139 = vpop.permute.xlu0 %138
  %141 = vrot.lane.b32.xlu0 %v20, 47
  %v142 = vpop.permute.xlu0 %141
  %v144 = vsel %vm24, %v139, %v142
  %145 = vrot.lane.b32.xlu0 %v18, 110
  %v146 = vpop.permute.xlu0 %145
  %148 = vrot.lane.b32.xlu0 %v20, 46
  %v149 = vpop.permute.xlu0 %148
  %v151 = vsel %vm24, %v146, %v149
  %152 = vrot.lane.b32.xlu0 %v18, 109
  %v153 = vpop.permute.xlu0 %152
  %155 = vrot.lane.b32.xlu0 %v20, 45
  %v156 = vpop.permute.xlu0 %155
  %v158 = vsel %vm24, %v153, %v156
  %159 = vrot.lane.b32.xlu0 %v18, 108
  %v160 = vpop.permute.xlu0 %159
  %162 = vrot.lane.b32.xlu0 %v20, 44
  %v163 = vpop.permute.xlu0 %162
  %v165 = vsel %vm24, %v160, %v163
  %166 = vrot.lane.b32.xlu0 %v18, 107
  %v167 = vpop.permute.xlu0 %166
  %169 = vrot.lane.b32.xlu0 %v20, 43
  %v170 = vpop.permute.xlu0 %169
  %v172 = vsel %vm24, %v167, %v170
  %173 = vrot.lane.b32.xlu0 %v18, 106
  %v174 = vpop.permute.xlu0 %173
  %176 = vrot.lane.b32.xlu0 %v20, 42
  %v177 = vpop.permute.xlu0 %176
  %v179 = vsel %vm24, %v174, %v177
  %180 = vrot.lane.b32.xlu0 %v18, 105
  %v181 = vpop.permute.xlu0 %180
  %183 = vrot.lane.b32.xlu0 %v20, 41
  %v184 = vpop.permute.xlu0 %183
  %v186 = vsel %vm24, %v181, %v184
  %187 = vrot.lane.b32.xlu0 %v18, 104
  %v188 = vpop.permute.xlu0 %187
  %190 = vrot.lane.b32.xlu0 %v20, 40
  %v191 = vpop.permute.xlu0 %190
  %v193 = vsel %vm24, %v188, %v191
  %194 = vrot.lane.b32.xlu0 %v18, 103
  %v195 = vpop.permute.xlu0 %194
  %197 = vrot.lane.b32.xlu0 %v20, 39
  %v198 = vpop.permute.xlu0 %197
  %v200 = vsel %vm24, %v195, %v198
  %201 = vrot.lane.b32.xlu0 %v18, 102
  %v202 = vpop.permute.xlu0 %201
  %204 = vrot.lane.b32.xlu0 %v20, 38
  %v205 = vpop.permute.xlu0 %204
  %v207 = vsel %vm24, %v202, %v205
  %208 = vrot.lane.b32.xlu0 %v18, 101
  %v209 = vpop.permute.xlu0 %208
  %211 = vrot.lane.b32.xlu0 %v20, 37
  %v212 = vpop.permute.xlu0 %211
  %v214 = vsel %vm24, %v209, %v212
  %215 = vrot.lane.b32.xlu0 %v18, 100
  %v216 = vpop.permute.xlu0 %215
  %218 = vrot.lane.b32.xlu0 %v20, 36
  %v219 = vpop.permute.xlu0 %218
  %v221 = vsel %vm24, %v216, %v219
  %222 = vrot.lane.b32.xlu0 %v18, 99
  %v223 = vpop.permute.xlu0 %222
  %225 = vrot.lane.b32.xlu0 %v20, 35
  %v226 = vpop.permute.xlu0 %225
  %v228 = vsel %vm24, %v223, %v226
  %229 = vrot.lane.b32.xlu0 %v18, 98
  %v230 = vpop.permute.xlu0 %229
  %232 = vrot.lane.b32.xlu0 %v20, 34
  %v233 = vpop.permute.xlu0 %232
  %v235 = vsel %vm24, %v230, %v233
  %236 = vrot.lane.b32.xlu0 %v18, 97
  %v237 = vpop.permute.xlu0 %236
  %239 = vrot.lane.b32.xlu0 %v20, 33
  %v240 = vpop.permute.xlu0 %239
  %v242 = vsel %vm24, %v237, %v240
  %243 = vrot.lane.b32.xlu0 %v18, 96
  %v244 = vpop.permute.xlu0 %243
  %246 = vrot.lane.b32.xlu0 %v20, 32
  %v247 = vpop.permute.xlu0 %246
  %v249 = vsel %vm24, %v244, %v247
  %250 = vrot.lane.b32.xlu0 %v18, 95
  %v251 = vpop.permute.xlu0 %250
  %253 = vrot.lane.b32.xlu0 %v20, 31
  %v254 = vpop.permute.xlu0 %253
  %v256 = vsel %vm24, %v251, %v254
  %257 = vrot.lane.b32.xlu0 %v18, 94
  %v258 = vpop.permute.xlu0 %257
  %260 = vrot.lane.b32.xlu0 %v20, 30
  %v261 = vpop.permute.xlu0 %260
  %v263 = vsel %vm24, %v258, %v261
  %264 = vrot.lane.b32.xlu0 %v18, 93
  %v265 = vpop.permute.xlu0 %264
  %267 = vrot.lane.b32.xlu0 %v20, 29
  %v268 = vpop.permute.xlu0 %267
  %v270 = vsel %vm24, %v265, %v268
  %271 = vrot.lane.b32.xlu0 %v18, 92
  %v272 = vpop.permute.xlu0 %271
  %274 = vrot.lane.b32.xlu0 %v20, 28
  %v275 = vpop.permute.xlu0 %274
  %v277 = vsel %vm24, %v272, %v275
  %278 = vrot.lane.b32.xlu0 %v18, 91
  %v279 = vpop.permute.xlu0 %278
  %281 = vrot.lane.b32.xlu0 %v20, 27
  %v282 = vpop.permute.xlu0 %281
  %v284 = vsel %vm24, %v279, %v282
  %285 = vrot.lane.b32.xlu0 %v18, 90
  %v286 = vpop.permute.xlu0 %285
  %288 = vrot.lane.b32.xlu0 %v20, 26
  %v289 = vpop.permute.xlu0 %288
  %v291 = vsel %vm24, %v286, %v289
  %292 = vrot.lane.b32.xlu0 %v18, 89
  %v293 = vpop.permute.xlu0 %292
  %295 = vrot.lane.b32.xlu0 %v20, 25
  %v296 = vpop.permute.xlu0 %295
  %v298 = vsel %vm24, %v293, %v296
  %v300 = vrot.slane %v32, 4
  %v303 = vrot.slane %v46, 4
  %v306 = vrot.slane %v60, 4
  %v309 = vrot.slane %v74, 4
  %v312 = vrot.slane %v88, 4
  %v315 = vrot.slane %v102, 4
  %v318 = vrot.slane %v116, 4
  %v321 = vrot.slane %v130, 4
  %vm323 = vcmask 1043456
  %v324 = vsel %vm323, %v25, %v300
  %v325 = vsel %vm323, %v39, %v303
  %v326 = vsel %vm323, %v53, %v306
  %v327 = vsel %vm323, %v67, %v309
  %v328 = vsel %vm323, %v81, %v312
  %v329 = vsel %vm323, %v95, %v315
  %v330 = vsel %vm323, %v109, %v318
  %v331 = vsel %vm323, %v123, %v321
  %v333 = vrot.slane %v144, 4
  %v336 = vrot.slane %v158, 4
  %v339 = vrot.slane %v172, 4
  %v342 = vrot.slane %v186, 4
  %v345 = vrot.slane %v200, 4
  %v348 = vrot.slane %v214, 4
  %v351 = vrot.slane %v228, 4
  %v354 = vrot.slane %v242, 4
  %v356 = vsel %vm323, %v137, %v333
  %v357 = vsel %vm323, %v151, %v336
  %v358 = vsel %vm323, %v165, %v339
  %v359 = vsel %vm323, %v179, %v342
  %v360 = vsel %vm323, %v193, %v345
  %v361 = vsel %vm323, %v207, %v348
  %v362 = vsel %vm323, %v221, %v351
  %v363 = vsel %vm323, %v235, %v354
  %v365 = vrot.slane %v256, 4
  %v368 = vrot.slane %v270, 4
  %v371 = vrot.slane %v284, 4
  %v374 = vrot.slane %v298, 4
  %v376 = vsel %vm323, %v249, %v365
  %v377 = vsel %vm323, %v263, %v368
  %v378 = vsel %vm323, %v277, %v371
  %v379 = vsel %vm323, %v291, %v374
  %v380 = vlaneseq
  %v381 = vand.u32 %v380, 127
  %vm382 = vcmp.lt.s32.totalorder %v381, 0
  %v383 = vsub.s32 0, %v381
  %v384 = vsel %vm382, %v383, %v381
  %v385 = vshrl.u32 %v384, 6
  %v386 = vand.u32 %v384, 63
  %v387 = vsub.s32 0, %v386
  %v388 = vsel %vm382, %v387, %v386
  %vm389 = vcmp.ne.s32.totalorder %v388, 0
  %vm390 = vcmp.lt.s32.totalorder %v388, 0
  %vm391 = vmand %vm390, %vm389
  %v392 = vadd.s32 %v388, 64
  %v393 = vsel %vm391, %v392, %v388
  %vm394 = vcmp.gt.s32.totalorder %v393, 0
  %v395 = vsel %vm394, %v357, -inf
  %vm396 = vcmp.lt.s32.totalorder %v393, 63
  %v397 = vsel %vm396, %v358, -inf
  %v399 = vrot.slane %v357, 4
  %v401 = vmax.f32 %v395, %v399
  %v402 = vmax.f32 %v401, %v397
  %v403 = vld [vmem:[%s1] sm:$0xff]
  %v404 = vld [vmem:[%s1 + $0x8] sm:$0xff]
  %v405 = vld [vmem:[%s1 + $0x10] sm:$0xff]
  %v406 = vld [vmem:[%s1 + $0x18] sm:$0xff]
  %v407 = vpack.c.bf16 %v325, %v324
  %v408 = vpack.c.bf16 %v327, %v326
  %v409 = vpack.c.bf16 %v329, %v328
  %v410 = vpack.c.bf16 %v331, %v330
  %v411 = vpack.c.bf16 %v357, %v356
  %v412 = vpack.c.bf16 %v359, %v358
  %v413 = vpack.c.bf16 %v361, %v360
  %v414 = vpack.c.bf16 %v363, %v362
  %v415 = vpack.c.bf16 %v377, %v376
  %v416 = vpack.c.bf16 %v379, %v378
  %v417 = vld [vmem:[%s2] sm:$0xff]
  %v418 = vld [vmem:[%s2 + $0x8] sm:$0xff]
  %v419 = vld [vmem:[%s2 + $0x10] sm:$0xff]
  %v420 = vld [vmem:[%s2 + $0x18] sm:$0xff]
  %vm421 = vcmask 31744
  %v423 = vsel %vm421, %v417, 0
  %v426 = vsel %vm421, %v418, 0
  %v429 = vsel %vm421, %v419, 0
  %v432 = vsel %vm421, %v420, 0
  %v435 = vsel %vm323, %v402, 0
  %437 = vmatprep.subr.mxu0 0.0
  %438 = vmatpush1.msra.mxu0 %v435
  %439 = vmatprep.subr.mxu0 0.0
  %440 = vmatpush1.msra.mxu0 0.0
  %441 = vmatprep.subr.mxu0 0.0
  %442 = vmatpush1.msra.mxu0 0.0
  %443 = vmatprep.subr.mxu0 0.0
  %444 = vmatpush1.msra.mxu0 0.0
  %445 = vmatprep.subr.mxu0 0.0
  %446 = vmatpush1.msra.mxu0 0.0
  %447 = vmatprep.subr.mxu0 0.0
  %448 = vmatpush1.msra.mxu0 0.0
  %449 = vmatprep.subr.mxu0 0.0
  %450 = vmatpush1.msra.mxu0 0.0
  %451 = vmatprep.subr.mxu0 0.0
  %452 = vmatpush1.msra.mxu0 0.0
  %453 = vmatprep.subr.mxu0 0.0
  %454 = vmatpush1.msra.mxu0 0.0
  %455 = vmatprep.subr.mxu0 0.0
  %456 = vmatpush1.msra.mxu0 0.0
  %457 = vmatprep.subr.mxu0 0.0
  %458 = vmatpush1.msra.mxu0 0.0
  %459 = vmatprep.subr.mxu0 0.0
  %460 = vmatpush1.msra.mxu0 0.0
  %461 = vmatprep.subr.mxu0 0.0
  %462 = vmatpush1.msra.mxu0 0.0
  %463 = vmatprep.subr.mxu0 0.0
  %464 = vmatpush1.msra.mxu0 0.0
  %465 = vmatprep.subr.mxu0 0.0
  %466 = vmatpush1.msra.mxu0 0.0
  %467 = vmatprep.subr.mxu0 0.0
  %468 = vmatpush1.msra.mxu0 0.0
  %469 = vmatprep.subr.mxu0 0.0
  %470 = vmatpush1.msra.mxu0 0.0
  %471 = vmatprep.subr.mxu0 0.0
  %472 = vmatpush1.msra.mxu0 0.0
  %473 = vmatprep.subr.mxu0 0.0
  %474 = vmatpush1.msra.mxu0 0.0
  %475 = vmatprep.subr.mxu0 0.0
  %476 = vmatpush1.msra.mxu0 0.0
  %477 = vmatprep.subr.mxu0 0.0
  %478 = vmatpush1.msra.mxu0 0.0
  %479 = vmatprep.subr.mxu0 0.0
  %480 = vmatpush1.msra.mxu0 0.0
  %481 = vmatprep.subr.mxu0 0.0
  %482 = vmatpush1.msra.mxu0 0.0
  %483 = vmatprep.subr.mxu0 0.0
  %484 = vmatpush1.msra.mxu0 0.0
  %485 = vmatprep.subr.mxu0 0.0
  %486 = vmatpush1.msra.mxu0 0.0
  %487 = vmatprep.subr.mxu0 0.0
  %488 = vmatpush1.msra.mxu0 0.0
  %489 = vmatprep.subr.mxu0 0.0
  %490 = vmatpush1.msra.mxu0 0.0
  %491 = vmatprep.subr.mxu0 0.0
  %492 = vmatpush1.msra.mxu0 0.0
  %493 = vmatprep.subr.mxu0 0.0
  %494 = vmatpush1.msra.mxu0 0.0
  %495 = vmatprep.subr.mxu0 0.0
  %496 = vmatpush1.msra.mxu0 0.0
  %497 = vmatprep.subr.mxu0 0.0
  %498 = vmatpush1.msra.mxu0 0.0
  %499 = vmatprep.subr.mxu0 0.0
  %500 = vmatpush1.msra.mxu0 0.0
  %501 = vmatprep.mubr.f32.mxu0 0.0
  %502 = vmatmul.mubr.f32.gmra.mrb[0].mxu0 %v423
  %v503 = vpop.f32.mrb[0].mxu0
  %v504 = vadd.f32 0.0, %v503
  %v505 = vpop.f32.mrb[0].mxu0
  %506 = vmatprep.mubr.f32.mxu0 0.0
  %507 = vmatmul.mubr.f32.gmra.mrb[0].mxu0 %v426
  %v508 = vpop.f32.mrb[0].mxu0
  %v509 = vadd.f32 0.0, %v508
  %v510 = vpop.f32.mrb[0].mxu0
  %511 = vmatprep.mubr.f32.mxu0 0.0
  %512 = vmatmul.mubr.f32.gmra.mrb[0].mxu0 %v429
  %v513 = vpop.f32.mrb[0].mxu0
  %v514 = vadd.f32 0.0, %v513
  %v515 = vpop.f32.mrb[0].mxu0
  %516 = vmatprep.mubr.f32.mxu0 0.0
  %517 = vmatmul.mubr.f32.gmra.mrb[0].mxu0 %v432
  %v518 = vpop.f32.mrb[0].mxu0
  %v519 = vadd.f32 0.0, %v518
  %v520 = vpop.f32.mrb[0].mxu0
  %521 = vdwg.mxu0
  %v526 = vunpack.c.l.b16 %v403
  %v527 = vunpack.c.h.b16 %v403
  %v528 = vunpack.c.l.b16 %v404
  %v529 = vunpack.c.h.b16 %v404
  %v530 = vunpack.c.l.b16 %v405
  %v531 = vunpack.c.h.b16 %v405
  %v532 = vunpack.c.l.b16 %v406
  %v533 = vunpack.c.h.b16 %v406
  %v534 = vpack.c.b16 %v528, %v526
  %v535 = vpack.c.b16 %v529, %v527
  %v536 = vpack.c.b16 %v532, %v530
  %v537 = vpack.c.b16 %v533, %v531
  %vm540 = vcmask 261120
  %v542 = vsel %vm540, %v535, 0
  %v545 = vsel %vm540, %v537, 0
  %547 = vmatprep.subr.bf16.mxu0 0
  %548 = vmatpush1.bf16.msra.mxu0 %v407
  %549 = vmatprep.subr.bf16.mxu0 0
  %550 = vmatpush1.bf16.msra.mxu0 %v408
  %551 = vmatprep.subr.bf16.mxu0 0
  %552 = vmatpush1.bf16.msra.mxu0 %v409
  %553 = vmatprep.subr.bf16.mxu0 0
  %554 = vmatpush1.bf16.msra.mxu0 %v410
  %555 = vmatprep.subr.bf16.mxu0 0
  %556 = vmatpush1.bf16.msra.mxu0 %v411
  %557 = vmatprep.subr.bf16.mxu0 0
  %558 = vmatpush1.bf16.msra.mxu0 %v412
  %559 = vmatprep.subr.bf16.mxu0 0
  %560 = vmatpush1.bf16.msra.mxu0 %v413
  %561 = vmatprep.subr.bf16.mxu0 0
  %562 = vmatpush1.bf16.msra.mxu0 %v414
  %563 = vmatprep.subr.bf16.mxu0 0
  %564 = vmatpush1.bf16.msra.mxu0 %v415
  %565 = vmatprep.subr.bf16.mxu0 0
  %566 = vmatpush1.bf16.msra.mxu0 %v416
  %567 = vmatprep.subr.bf16.mxu0 0
  %568 = vmatpush1.bf16.msra.mxu0 0
  %569 = vmatprep.subr.bf16.mxu0 0
  %570 = vmatpush1.bf16.msra.mxu0 0
  %571 = vmatprep.subr.bf16.mxu0 0
  %572 = vmatpush1.bf16.msra.mxu0 0
  %573 = vmatprep.subr.bf16.mxu0 0
  %574 = vmatpush1.bf16.msra.mxu0 0
  %575 = vmatprep.subr.bf16.mxu0 0
  %576 = vmatpush1.bf16.msra.mxu0 0
  %577 = vmatprep.subr.bf16.mxu0 0
  %578 = vmatpush1.bf16.msra.mxu0 0
  %579 = vmatprep.mubr.bf16.mxu0 %v542
  %580 = vmatmul.mubr.bf16.gmra.mrb[0].mxu0 %v534
  %v581 = vpop.f32.mrb[0].mxu0
  %v582 = vadd.f32 %v504, %v581
  %v583 = vpop.f32.mrb[0].mxu0
  %v584 = vpop.f32.mrb[0].mxu0
  %v585 = vadd.f32 %v509, %v584
  %v586 = vpop.f32.mrb[0].mxu0
  %587 = vmatprep.mubr.bf16.mxu0 %v545
  %588 = vmatmul.mubr.bf16.gmra.mrb[0].mxu0 %v536
  %v589 = vpop.f32.mrb[0].mxu0
  %v590 = vadd.f32 %v514, %v589
  %v591 = vpop.f32.mrb[0].mxu0
  %v592 = vpop.f32.mrb[0].mxu0
  %v593 = vadd.f32 %v519, %v592
  %v594 = vpop.f32.mrb[0].mxu0
  %595 = vdwg.mxu0
  %v596 = vld [vmem:[%s3] sm:$0xff]
  %v597 = vld [vmem:[%s3 + $0x8] sm:$0xff]
  %v598 = vld [vmem:[%s3 + $0x10] sm:$0xff]
  %v599 = vld [vmem:[%s3 + $0x18] sm:$0xff]
  %601 = vset.pattern.permute.xlu0 0
  %602 = vperm.xlu0 %601, %v596
  %v603 = vpop.permute.xlu0 %602
  %606 = vset.pattern.permute.xlu0 0
  %607 = vperm.xlu0 %606, %v597
  %v608 = vpop.permute.xlu0 %607
  %611 = vset.pattern.permute.xlu0 0
  %612 = vperm.xlu0 %611, %v598
  %v613 = vpop.permute.xlu0 %612
  %616 = vset.pattern.permute.xlu0 0
  %617 = vperm.xlu0 %616, %v599
  %v618 = vpop.permute.xlu0 %617
  %v620 = vadd.f32 %v582, %v603
  %v621 = vadd.f32 %v585, %v608
  %v622 = vadd.f32 %v590, %v613
  %v623 = vadd.f32 %v593, %v618
  %v624 = vmax.f32 %v620, 0.0
  %v625 = vmax.f32 %v621, 0.0
  %v626 = vmax.f32 %v622, 0.0
  %v627 = vmax.f32 %v623, 0.0
  %628 = vst [vmem:[%s4] sm:$0xff] %v624
  %629 = vst [vmem:[%s4 + $0x8] sm:$0xff] %v625
  %630 = vst [vmem:[%s4 + $0x10] sm:$0xff] %v626
  %631 = vst [vmem:[%s4 + $0x18] sm:$0xff] %v627
  // Predicated region
  $region18: #{inception_forward.1} parent=0 // pred_check
    _
  $region19: #{inception_forward.1} parent=0 // pred_check_branch
    %633 = sbr.rel (0) target = $region21
  $region20: #{inception_forward.1} parent=0 // pred_region
    _
  $region21: #{inception_forward.1} parent=0 // pred_fallthru
    _
  // Predicated region
  $region22: #{inception_forward.1} parent=0 // pred_check
    _
  $region23: #{inception_forward.1} parent=0 // pred_check_branch
    %635 = sbr.rel (0) target = $region25
  $region24: #{inception_forward.1} parent=0 // pred_region
    _
  $region25: #{inception_forward.1} parent=0 // pred_fallthru
    _

</llo_original>
